<compile_context>
chip_gen: v6e
topology: v6e:2x2x1
jax: 0.10.0
libtpu: 0.0.40
codegen_flags: <defaults>
</compile_context>

<pallas_src>
import functools

import jax
import jax.numpy as jnp
from jax.experimental import pallas as pl
from jax.experimental.pallas import tpu as pltpu


def _round_up(x: int, m: int) -> int:
    return (x + m - 1) // m * m


def _rmsnorm_kernel(x_ref, w_ref, o_ref, *, eps: float, inv_dim: float):
    # x_ref: (tile_rows, dim), w_ref: (1, dim), o_ref: (tile_rows, dim)
    # Sum of squares in f32 over the true dim (no padding anywhere).
    xf = x_ref[...].astype(jnp.float32)
    ms = jnp.sum(xf * xf, axis=-1, keepdims=True) * inv_dim
    inv = jax.lax.rsqrt(ms + eps)                         # EUP rsqrt (free slot)
    # Re-read x so the f32 copy above need not stay live across the reduction.
    normed = x_ref[...].astype(jnp.float32) * inv
    if x_ref.dtype != jnp.float32:
        # Matches PyTorch `.type_as(x)` intermediate cast; skipped when identity.
        normed = normed.astype(x_ref.dtype).astype(jnp.float32)
    o_ref[...] = (normed * w_ref[...].astype(jnp.float32)).astype(o_ref.dtype)


def _pick_tile_and_vmem(rows: int, dim: int, x_it: int, out_it: int, w_it: int):
    """Row tile sized from VMEM capacity, including f32 temporaries."""
    try:
        vmem_cap = int(pltpu.get_tpu_info().vmem_capacity_bytes)
    except Exception:  # pragma: no cover — conservative fallback (v7x = 64 MiB)
        vmem_cap = 64 * 1024 * 1024

    sublane = 8 if x_it >= 4 else (16 if x_it == 2 else 32)

    per_row_io = dim * (x_it + out_it)            # one input row + one output row
    per_row_pipe = 2 * per_row_io                 # double-buffered by Pallas
    per_row_tmp = 2 * dim * 4                     # in-kernel f32 up-cast temps
    per_row_total = per_row_pipe + per_row_tmp

    target_step_bytes = 16 * 1024 * 1024          # amortize ~0.35 us/step overhead
    budget = int(vmem_cap * 0.6)                  # headroom for compiler scratch

    tile = min(target_step_bytes // max(per_row_io, 1),
               budget // max(per_row_total, 1))
    tile = max(int(tile), 1)

    # Keep the grid >= ~8 steps for load balance across v7x's 2 TensorCores, as
    # long as every step still moves >= 1 MiB of in+out traffic.
    cap = rows // 8
    cap -= cap % sublane
    if cap >= sublane and cap * per_row_io >= (1 << 20):
        tile = min(tile, cap)

    if tile >= rows:
        tile = rows                               # one full-array block (always legal)
    else:
        tile = max(tile - tile % sublane, sublane)
        tile = min(tile, rows)

    io_block = 2 * tile * dim * (x_it + out_it)
    tmp_block = 2 * tile * dim * 4
    w_block = 2 * 8 * dim * max(w_it, 4)
    vmem_limit = int((io_block + tmp_block + w_block) * 1.2) + (2 << 20)
    vmem_limit = min(max(vmem_limit, 16 << 20), vmem_cap)
    return tile, vmem_limit


def rmsnorm(x: jax.Array, weight: jax.Array, eps: float, out_dtype=None) -> jax.Array:
    """RMSNorm over the last axis of x, matching the PyTorch reference forward."""
    orig_shape = x.shape
    dim = orig_shape[-1]
    rows = 1
    for s in orig_shape[:-1]:
        rows *= s

    if out_dtype is None:
        out_dtype = jnp.promote_types(x.dtype, weight.dtype)
    out_dtype = jnp.dtype(out_dtype)

    # No padding / slicing: lane axis stays the true dim in every block.
    x2d = x.reshape(rows, dim)
    w2d = weight.reshape(1, dim)

    tile_rows, vmem_limit = _pick_tile_and_vmem(
        rows, dim, x2d.dtype.itemsize, out_dtype.itemsize, w2d.dtype.itemsize)

    grid = (pl.cdiv(rows, tile_rows),)  # ragged last block masked by Pallas

    out = pl.pallas_call(
        functools.partial(_rmsnorm_kernel, eps=eps, inv_dim=1.0 / dim),
        out_shape=jax.ShapeDtypeStruct((rows, dim), out_dtype),
        grid_spec=pltpu.PrefetchScalarGridSpec(
            num_scalar_prefetch=0,
            grid=grid,
            in_specs=[
                pl.BlockSpec((tile_rows, dim), lambda i: (i, 0)),
                pl.BlockSpec((1, dim), lambda i: (0, 0)),
            ],
            out_specs=pl.BlockSpec((tile_rows, dim), lambda i: (i, 0)),
        ),
        compiler_params=pltpu.CompilerParams(
            dimension_semantics=("parallel",),   # shards the row grid across TCs
            vmem_limit_bytes=vmem_limit,
        ),
    )(x2d, w2d)

    return out.reshape(orig_shape)


def rmsnorm_ref(x, weight, eps):
    xf = x.astype(jnp.float32)
    inv = jax.lax.rsqrt(jnp.mean(xf * xf, axis=-1, keepdims=True) + eps)
    return ((xf * inv).astype(x.dtype)) * weight


if __name__ == "__main__":
    key = jax.random.PRNGKey(0)
    batch, seq, hidden = 2, 8, 32
    eps = 1e-5

    x = jax.random.normal(key, (batch, seq, hidden), dtype=jnp.float32)
    # nn.Parameter(torch.ones(dim)) — deterministic init
    weight = jnp.ones((hidden,), dtype=jnp.float32)

    out = jax.block_until_ready(rmsnorm(x, weight, eps))

    ref = rmsnorm_ref(x, weight, eps)
    assert out.shape == x.shape and out.dtype == ref.dtype
    assert jnp.allclose(out, ref, atol=1e-5, rtol=1e-5)

    print("KERNEL_OK")
</pallas_src>

<mosaic_0001>
module attributes {stable_mosaic.version = 11 : i64} {
  func.func @_rmsnorm_kernel(%arg0: i32, %arg1: memref<16x32xf32, #tpu.memory_space<vmem>>, %arg2: memref<1x32xf32, #tpu.memory_space<vmem>>, %arg3: memref<16x32xf32, #tpu.memory_space<vmem>>) attributes {dimension_semantics = [#tpu.dimension_semantics<parallel>], iteration_bounds = array<i64: 1>, scalar_prefetch = 0 : i64, scratch_operands = 0 : i64, tpu.core_type = #tpu.core_type<tc>, window_params = [{transform_indices = @transform_0, window_bounds = array<i64: 16, 32>}, {pipeline_mode = #tpu.pipeline_mode<synchronous>, transform_indices = @transform_1, window_bounds = array<i64: 1, 32>}, {transform_indices = @transform_2, window_bounds = array<i64: 16, 32>}]} {
    %c0 = arith.constant 0 : index
    %c0_0 = arith.constant 0 : index
    %0 = vector.load %arg1[%c0, %c0_0] : memref<16x32xf32, #tpu.memory_space<vmem>>, vector<16x32xf32>
    %1 = arith.mulf %0, %0 : vector<16x32xf32>
    %cst = arith.constant dense<0.000000e+00> : vector<16xf32>
    %2 = vector.multi_reduction <add>, %1, %cst [1] : vector<16x32xf32> to vector<16xf32>
    %3 = vector.shape_cast %2 : vector<16xf32> to vector<16x1xf32>
    %cst_1 = arith.constant 3.125000e-02 : f32
    %4 = vector.broadcast %cst_1 : f32 to vector<16x1xf32>
    %5 = arith.mulf %3, %4 : vector<16x1xf32>
    %cst_2 = arith.constant 9.99999974E-6 : f32
    %6 = vector.broadcast %cst_2 : f32 to vector<16x1xf32>
    %7 = arith.addf %5, %6 : vector<16x1xf32>
    %8 = math.rsqrt %7 : vector<16x1xf32>
    %c0_3 = arith.constant 0 : index
    %c0_4 = arith.constant 0 : index
    %9 = vector.load %arg1[%c0_3, %c0_4] : memref<16x32xf32, #tpu.memory_space<vmem>>, vector<16x32xf32>
    %10 = vector.broadcast %8 : vector<16x1xf32> to vector<16x32xf32>
    %11 = arith.mulf %9, %10 : vector<16x32xf32>
    %c0_5 = arith.constant 0 : index
    %c0_6 = arith.constant 0 : index
    %12 = vector.load %arg2[%c0_5, %c0_6] : memref<1x32xf32, #tpu.memory_space<vmem>>, vector<1x32xf32>
    %13 = vector.broadcast %12 : vector<1x32xf32> to vector<16x32xf32>
    %14 = arith.mulf %11, %13 : vector<16x32xf32>
    %c0_7 = arith.constant 0 : index
    %c0_8 = arith.constant 0 : index
    %15 = vector.load %arg3[%c0_7, %c0_8] : memref<16x32xf32, #tpu.memory_space<vmem>>, vector<16x32xf32>
    tpu.vector_store %arg3[%c0_7, %c0_8], %14 {strides = array<i32>} : memref<16x32xf32, #tpu.memory_space<vmem>>, vector<16x32xf32>,
    return
  }
  func.func @transform_0(%arg0: i32) -> (i32, i32) {
    %c0_i32 = arith.constant 0 : i32
    %c0_i32_0 = arith.constant 0 : i32
    return %arg0, %c0_i32 : i32, i32
  }
  func.func @transform_1(%arg0: i32) -> (i32, i32) {
    %c0_i32 = arith.constant 0 : i32
    %c0_i32_0 = arith.constant 0 : i32
    %c0_i32_1 = arith.constant 0 : i32
    return %c0_i32, %c0_i32_0 : i32, i32
  }
  func.func @transform_2(%arg0: i32) -> (i32, i32) {
    %c0_i32 = arith.constant 0 : i32
    %c0_i32_0 = arith.constant 0 : i32
    return %arg0, %c0_i32 : i32, i32
  }
}

</mosaic_0001>

<llo_original>
// kernel: tpu_custom_call.1
$region0: #{tpu_custom_call.1}
  #allocation0 [shape = 'u32[]', space=smem, size = 0x4, offset = 0x4, fixed_abs, tag = 'smem constant byte address 0x4 - core index']
  #allocation1 [shape = 'u32[144,128]{1,0:T(1,128)}', space=vmem, size = 0x12000, scoped, tag = 'internal scratch']
  %s0 = inlined_call_operand.hbm [shape: f32[16,32], index: 0, kind: input, shape index: {}]
  %s1 = inlined_call_operand.vmem [shape: f32[1,32], index: 1, kind: input, shape index: {}]
  %s2 = inlined_call_operand.hbm [shape: f32[16,32], index: 2, kind: output, shape index: {}]
  %s3 = sld [smem:[#allocation0]]
  $region22: #{tpu_custom_call.1} parent=0
    _
  %s5 = ssub.s32 1, %s3
  %s6 = scalar_select 0, %s5, %s3
  $region1: #{tpu_custom_call.1} parent=0
    #allocation2 [shape = 'u8[8192]{0}', space=vmem, size = 0x2000, scoped, tag = 'input window, operand 0, single buffered']
    #allocation3 [shape = 's32[1]{0}', space=sflag, size = 0x4, scoped, tag = 'scoped memory for tpu_custom_call.1']
    #allocation4 [shape = 's32[1]{0}', space=sflag, size = 0x4, scoped, tag = 'scoped memory for tpu_custom_call.1']
    #allocation5 [shape = 'u8[8192]{0}', space=vmem, size = 0x2000, scoped, tag = 'output window, operand 0, single buffered']
    %7 = vsyncpa [#allocation3], 0
    %8 = vsyncpa [#allocation4], 0
    // Predicated region
    $region2: #{tpu_custom_call.1} parent=1 // pred_check
      _
    $region3: #{tpu_custom_call.1} parent=1 // pred_check_branch
      %10 = sbr.rel (0) target = $region5
    $region4: #{tpu_custom_call.1} parent=1 // pred_region
      %s12 = ssub.s32 256, 256
      %13 = vsyncadd [#allocation3], %s12
      %s14 = sshll.u32 [#allocation2], 4
      %s15 = int_to_ptr.vmem [resolvable:$true] %s14
      %20 = dma.hbm_to_vmem [thread:$0]  %s0, 256, %s15, [#allocation3], 128, 128, 8
    $region5: #{tpu_custom_call.1} parent=1 // pred_fallthru
      _
    // Predicated region
    $region6: #{tpu_custom_call.1} parent=1 // pred_check
      _
    $region7: #{tpu_custom_call.1} parent=1 // pred_check_branch
      %22 = sbr.rel (0) target = $region9
    $region8: #{tpu_custom_call.1} parent=1 // pred_region
      _
    $region9: #{tpu_custom_call.1} parent=1 // pred_fallthru
      _
    // Predicated region
    $region10: #{tpu_custom_call.1} parent=1 // pred_check
      _
    $region11: #{tpu_custom_call.1} parent=1 // pred_check_branch
      %24 = sbr.rel (0) target = $region13
    $region12: #{tpu_custom_call.1} parent=1 // pred_region
      %25 = dma.done [#allocation3], 256
    $region13: #{tpu_custom_call.1} parent=1 // pred_fallthru
      _
    %v26 = vld [vmem:[#allocation2] sm:$0xff]
    %v27 = vld [vmem:[#allocation2 + $0x8] sm:$0xff]
    %v28 = vmul.f32 %v26, %v26
    %v29 = vmul.f32 %v27, %v27
    %vm30 = vcmask 261120
    %v31 = vsel %vm30, %v28, 0.0
    %32 = vadd.xlane.f32.xlu0 %v31
    %v33 = vpop.xlane.xlu0 %32
    %v34 = vsel %vm30, %v29, 0.0
    %35 = vadd.xlane.f32.xlu0 %v34
    %v36 = vpop.xlane.xlu0 %35
    %v37 = vmul.f32 %v33, 0.03125
    %v38 = vmul.f32 %v36, 0.03125
    %v39 = vadd.f32 %v37, 1e-05
    %v40 = vadd.f32 %v38, 1e-05
    %v41 = vrsqrt.pop %v39
    %v42 = vrsqrt.pop %v40
    %v43 = vmul.f32 %v26, %v41
    %v44 = vmul.f32 %v27, %v42
    %v45 = vld [vmem:[%s1] sm:$0x1]
    %v47 = vlaneseq
    %v48 = vshrl.u32 %v47, 7
    %v49 = vsub.s32 0, %v48
    %v50 = vrot.slane %v45, %v49
    %v52 = vmul.f32 %v43, %v50
    %v53 = vmul.f32 %v44, %v50
    %54 = vst.msk [vmem:[#allocation5] sm:$0xff] %vm30, %v52
    %55 = vst.msk [vmem:[#allocation5 + $0x8] sm:$0xff] %vm30, %v53
    // Predicated region
    $region14: #{tpu_custom_call.1} parent=1 // pred_check
      _
    $region15: #{tpu_custom_call.1} parent=1 // pred_check_branch
      %57 = sbr.rel (0) target = $region17
    $region16: #{tpu_custom_call.1} parent=1 // pred_region
      %s59 = ssub.s32 256, 256
      %60 = vsyncadd [#allocation4], %s59
      %s61 = sshll.u32 [#allocation5], 4
      %s62 = int_to_ptr.vmem [resolvable:$true] %s61
      %67 = dma.vmem_to_hbm [thread:$0]  %s62, 256, %s2, [#allocation4], 128, 128, 8
    $region17: #{tpu_custom_call.1} parent=1 // pred_fallthru
      _
    // Predicated region
    $region18: #{tpu_custom_call.1} parent=1 // pred_check
      _
    $region19: #{tpu_custom_call.1} parent=1 // pred_check_branch
      %69 = sbr.rel (0) target = $region21
    $region20: #{tpu_custom_call.1} parent=1 // pred_region
      %70 = dma.done [#allocation4], 256
    $region21: #{tpu_custom_call.1} parent=1 // pred_fallthru
      _
    %71 = vsyncpa [#allocation3], 1
    %72 = vsyncpa [#allocation4], 1

</llo_original>
